<compile_context>
chip_gen: v6e
topology: v6e:2x2x1
jax: 0.10.0
libtpu: 0.0.40
codegen_flags: <defaults>
</compile_context>

<pallas_src>
import random

import jax
import jax.numpy as jnp
import numpy as np
from jax.experimental import pallas as pl
from jax.experimental.pallas import tpu as pltpu


def _round_up(x: int, m: int) -> int:
    return ((x + m - 1) // m) * m


def _tile_and_pad(dim: int, tile_pref: int, align: int):
    """Pick a tile size (multiple of `align`, <= tile_pref) and padded dim."""
    dim = max(int(dim), 1)
    tile = min(tile_pref, _round_up(dim, align))
    padded = _round_up(dim, tile)
    return tile, padded


def mean_agg_kernel(inv_ref, mask_ref, emb_ref, out_ref, acc_ref):
    """Tiled, accumulator-resident mask @ embed with deferred normalization.

    inv_ref : (tile_B, 1)       f32  precomputed 1/neighbor_count (0 for pad rows)
    mask_ref: (tile_B, tile_U)  bf16 0/1 membership mask tile
    emb_ref : (tile_U, tile_D)  bf16 embedding tile
    out_ref : (tile_B, tile_D)  f32  mean-aggregated features
    acc_ref : (tile_B, tile_D)  f32  VMEM accumulator (resident over k)
    """
    k = pl.program_id(2)

    @pl.when(k == 0)
    def _init():
        acc_ref[...] = jnp.zeros_like(acc_ref)

    acc_ref[...] += jnp.dot(mask_ref[...], emb_ref[...],
                            preferred_element_type=jnp.float32)

    @pl.when(k == pl.num_programs(2) - 1)
    def _finalize():
        out_ref[...] = (acc_ref[...] * inv_ref[...]).astype(out_ref.dtype)


def mean_aggregate_pallas(mask_p, inv_p, embed_p, *, tile_b, tile_u, tile_d):
    """mask_p: (Bp, Up) bf16, inv_p: (Bp, 1) f32, embed_p: (Up, Dp) bf16
    -> (Bp, Dp) f32 mean-aggregated features (padded)."""
    Bp, Up = mask_p.shape
    Up2, Dp = embed_p.shape
    assert Up == Up2
    assert Bp % tile_b == 0 and Up % tile_u == 0 and Dp % tile_d == 0

    grid = (Bp // tile_b, Dp // tile_d, Up // tile_u)

    bytes_accessed = (
        mask_p.size * mask_p.dtype.itemsize * (Dp // tile_d)   # mask re-read per j
        + embed_p.size * embed_p.dtype.itemsize * (Bp // tile_b)  # embed re-read per i
        + inv_p.size * inv_p.dtype.itemsize
        + Bp * Dp * 4)                                         # f32 output
    cost = pl.CostEstimate(flops=2 * Bp * Up * Dp,
                           transcendentals=0,
                           bytes_accessed=bytes_accessed)

    return pl.pallas_call(
        mean_agg_kernel,
        out_shape=jax.ShapeDtypeStruct((Bp, Dp), jnp.float32),
        grid_spec=pltpu.PrefetchScalarGridSpec(
            num_scalar_prefetch=0,
            grid=grid,
            in_specs=[
                pl.BlockSpec((tile_b, 1), lambda i, j, k: (i, 0)),
                pl.BlockSpec((tile_b, tile_u), lambda i, j, k: (i, k)),
                pl.BlockSpec((tile_u, tile_d), lambda i, j, k: (k, j)),
            ],
            out_specs=pl.BlockSpec((tile_b, tile_d), lambda i, j, k: (i, j)),
            scratch_shapes=[pltpu.VMEM((tile_b, tile_d), jnp.float32)],
        ),
        compiler_params=pltpu.CompilerParams(
            dimension_semantics=("parallel", "parallel", "arbitrary")),
        cost_estimate=cost,
    )(inv_p, mask_p, embed_p)


class MeanAggregatorJAX:
    """JAX/Pallas port of the PyTorch MeanAggregator."""

    def __init__(self, features, gcn: bool = False,
                 tile_b_pref: int = 256, tile_u_pref: int = 1024,
                 tile_d_pref: int = 256):
        # features: callable mapping an int array of node ids -> (n, D) float32
        self.features = features
        self.gcn = gcn
        self.tile_b_pref = tile_b_pref
        self.tile_u_pref = tile_u_pref
        self.tile_d_pref = tile_d_pref

    def forward(self, nodes, to_neighs, num_sample=10):
        # ---- host-side graph preprocessing (pure Python, same as torch) ----
        _set = set
        if num_sample is not None:
            _sample = random.sample
            samp_neighs = [
                _set(_sample(sorted(to_neigh), num_sample))
                if len(to_neigh) >= num_sample else _set(to_neigh)
                for to_neigh in to_neighs
            ]
        else:
            samp_neighs = [_set(to_neigh) for to_neigh in to_neighs]
        if self.gcn:
            samp_neighs = [
                samp_neigh.union({int(nodes[i])})
                for i, samp_neigh in enumerate(samp_neighs)
            ]
        unique_nodes_list = list(set.union(*samp_neighs))
        unique_nodes = {n: i for i, n in enumerate(unique_nodes_list)}

        B = len(samp_neighs)
        U = len(unique_nodes_list)
        tb, Bp = _tile_and_pad(B, self.tile_b_pref, 8)
        tu, Up = _tile_and_pad(U, self.tile_u_pref, 128)

        # Build the mask directly into the padded buffer on host, cast to bf16
        # on host (0/1 values are exact in bf16).
        mask_np = np.zeros((Bp, Up), dtype=np.float32)
        column_indices = [unique_nodes[n] for samp_neigh in samp_neighs
                          for n in samp_neigh]
        row_indices = [i for i in range(len(samp_neighs))
                       for _ in range(len(samp_neighs[i]))]
        mask_np[row_indices, column_indices] = 1.0
        mask_bf16 = jnp.asarray(mask_np.astype(jnp.bfloat16))

        # Exact per-row reciprocal neighbor counts (counts include the self
        # node when gcn=True, since samp_neighs was already updated above).
        counts = np.array([len(s) for s in samp_neighs], dtype=np.float32)
        inv_np = np.zeros((Bp, 1), dtype=np.float32)
        inv_np[:B, 0] = 1.0 / np.maximum(counts, 1.0)  # guard empty rows -> 0 output
        inv_p = jnp.asarray(inv_np)

        # Embedding gather: pad the id list on host (extra rows hit only
        # all-zero mask columns), pad feature dim if needed, cast to bf16.
        ids_np = np.zeros((Up,), dtype=np.int32)
        ids_np[:U] = np.asarray(unique_nodes_list, dtype=np.int32)
        embed_matrix = self.features(jnp.asarray(ids_np))
        D = int(embed_matrix.shape[1])
        td, Dp = _tile_and_pad(D, self.tile_d_pref, 128)
        if Dp != D:
            embed_matrix = jnp.pad(embed_matrix, ((0, 0), (0, Dp - D)))
        embed_bf16 = embed_matrix.astype(jnp.bfloat16)

        # ---- device-side fused accumulate + normalize-at-finalize kernel ----
        out_p = mean_aggregate_pallas(mask_bf16, inv_p, embed_bf16,
                                      tile_b=tb, tile_u=tu, tile_d=td)
        return out_p[:B, :D]


if __name__ == "__main__":
    random.seed(0)
    np_rng = np.random.default_rng(0)
    key = jax.random.PRNGKey(0)

    num_total_nodes = 400
    feat_dim = 32
    batch = 32
    neighbors_per_node = 8
    num_sample = 10  # > neighbors_per_node -> deterministic (no random sampling)

    # deterministic synthetic embedding table; features() is an id -> row lookup
    embed_table = jax.random.normal(key, (num_total_nodes, feat_dim),
                                    dtype=jnp.float32)

    def features(ids):
        return jnp.take(embed_table, ids, axis=0)

    nodes = list(range(batch))
    to_neighs = [
        set(np_rng.choice(num_total_nodes, size=neighbors_per_node,
                          replace=False).tolist())
        for _ in range(batch)
    ]

    # pure-NumPy reference (no sampling happened, so neighbors == to_neighs)
    table_np = np.asarray(embed_table)
    ref = np.stack([table_np[sorted(s)].mean(axis=0) for s in to_neighs])

    # 1) production tile preferences (single k step at this small size)
    agg = MeanAggregatorJAX(features, gcn=False)
    out = jax.block_until_ready(agg.forward(nodes, to_neighs,
                                            num_sample=num_sample))
    assert out.shape == (batch, feat_dim)
    assert bool(jnp.all(jnp.isfinite(out)))
    np.testing.assert_allclose(np.asarray(out), ref, rtol=2e-2, atol=2e-2)

    # 2) small tiles to exercise the multi-step (i, j, k) accumulator path
    agg_small = MeanAggregatorJAX(features, gcn=False,
                                  tile_b_pref=8, tile_u_pref=128,
                                  tile_d_pref=128)
    out_small = jax.block_until_ready(agg_small.forward(nodes, to_neighs,
                                                        num_sample=num_sample))
    np.testing.assert_allclose(np.asarray(out_small), ref, rtol=2e-2, atol=2e-2)

    print("KERNEL_OK")
</pallas_src>

<mosaic_0001>
module attributes {stable_mosaic.version = 11 : i64} {
  func.func @mean_agg_kernel(%arg0: i32, %arg1: i32, %arg2: i32, %arg3: memref<32x1xf32, #tpu.memory_space<vmem>>, %arg4: memref<32x256xbf16, #tpu.memory_space<vmem>>, %arg5: memref<256x128xbf16, #tpu.memory_space<vmem>>, %arg6: memref<32x128xf32, #tpu.memory_space<vmem>>, %arg7: memref<32x128xf32, #tpu.memory_space<vmem>>) attributes {dimension_semantics = [#tpu.dimension_semantics<parallel>, #tpu.dimension_semantics<parallel>, #tpu.dimension_semantics<arbitrary>], iteration_bounds = array<i64: 1, 1, 1>, scalar_prefetch = 0 : i64, scratch_operands = 1 : i64, tpu.core_type = #tpu.core_type<tc>, window_params = [{transform_indices = @transform_0, window_bounds = array<i64: 32, 1>}, {transform_indices = @transform_1, window_bounds = array<i64: 32, 256>}, {transform_indices = @transform_2, window_bounds = array<i64: 256, 128>}, {transform_indices = @transform_3, window_bounds = array<i64: 32, 128>}]} {
    %c0_i32 = arith.constant 0 : i32
    %0 = arith.cmpi eq, %arg2, %c0_i32 : i32
    %1 = arith.extui %0 : i1 to i32
    %c0_i32_0 = arith.constant 0 : i32
    %2 = arith.cmpi ne, %1, %c0_i32_0 : i32
    scf.if %2 {
      %cst_10 = arith.constant 0.000000e+00 : f32
      %12 = vector.broadcast %cst_10 : f32 to vector<32x128xf32>
      %c0_11 = arith.constant 0 : index
      %c0_12 = arith.constant 0 : index
      %13 = vector.load %arg7[%c0_11, %c0_12] : memref<32x128xf32, #tpu.memory_space<vmem>>, vector<32x128xf32>
      tpu.vector_store %arg7[%c0_11, %c0_12], %12 {strides = array<i32>} : memref<32x128xf32, #tpu.memory_space<vmem>>, vector<32x128xf32>,
    } else {
    }
    %c0 = arith.constant 0 : index
    %c0_1 = arith.constant 0 : index
    %3 = vector.load %arg7[%c0, %c0_1] : memref<32x128xf32, #tpu.memory_space<vmem>>, vector<32x128xf32>
    %c0_2 = arith.constant 0 : index
    %c0_3 = arith.constant 0 : index
    %4 = vector.load %arg4[%c0_2, %c0_3] : memref<32x256xbf16, #tpu.memory_space<vmem>>, vector<32x256xbf16>
    %c0_4 = arith.constant 0 : index
    %c0_5 = arith.constant 0 : index
    %5 = vector.load %arg5[%c0_4, %c0_5] : memref<256x128xbf16, #tpu.memory_space<vmem>>, vector<256x128xbf16>
    %cst = arith.constant dense<0.000000e+00> : vector<32x128xf32>
    %6 = tpu.matmul %4, %5, %cst {dimension_numbers = #tpu.dot_dimension_numbers<[1], [0], [0], [1], [0, 0, 1, 1], [], []>} : vector<32x256xbf16>, vector<256x128xbf16>, vector<32x128xf32> -> vector<32x128xf32>
    %7 = arith.addf %3, %6 : vector<32x128xf32>
    %c0_6 = arith.constant 0 : index
    %c0_7 = arith.constant 0 : index
    %8 = vector.load %arg7[%c0_6, %c0_7] : memref<32x128xf32, #tpu.memory_space<vmem>>, vector<32x128xf32>
    tpu.vector_store %arg7[%c0_6, %c0_7], %7 {strides = array<i32>} : memref<32x128xf32, #tpu.memory_space<vmem>>, vector<32x128xf32>,
    %c0_i32_8 = arith.constant 0 : i32
    %9 = arith.cmpi eq, %arg2, %c0_i32_8 : i32
    %10 = arith.extui %9 : i1 to i32
    %c0_i32_9 = arith.constant 0 : i32
    %11 = arith.cmpi ne, %10, %c0_i32_9 : i32
    scf.if %11 {
      %c0_10 = arith.constant 0 : index
      %c0_11 = arith.constant 0 : index
      %12 = vector.load %arg7[%c0_10, %c0_11] : memref<32x128xf32, #tpu.memory_space<vmem>>, vector<32x128xf32>
      %c0_12 = arith.constant 0 : index
      %c0_13 = arith.constant 0 : index
      %13 = vector.load %arg3[%c0_12, %c0_13] : memref<32x1xf32, #tpu.memory_space<vmem>>, vector<32x1xf32>
      %14 = vector.broadcast %13 : vector<32x1xf32> to vector<32x128xf32>
      %15 = arith.mulf %12, %14 : vector<32x128xf32>
      %c0_14 = arith.constant 0 : index
      %c0_15 = arith.constant 0 : index
      %16 = vector.load %arg6[%c0_14, %c0_15] : memref<32x128xf32, #tpu.memory_space<vmem>>, vector<32x128xf32>
      tpu.vector_store %arg6[%c0_14, %c0_15], %15 {strides = array<i32>} : memref<32x128xf32, #tpu.memory_space<vmem>>, vector<32x128xf32>,
    } else {
    }
    return
  }
  func.func @transform_0(%arg0: i32, %arg1: i32, %arg2: i32) -> (i32, i32) {
    %c0_i32 = arith.constant 0 : i32
    %c0_i32_0 = arith.constant 0 : i32
    return %arg0, %c0_i32 : i32, i32
  }
  func.func @transform_1(%arg0: i32, %arg1: i32, %arg2: i32) -> (i32, i32) {
    %c0_i32 = arith.constant 0 : i32
    return %arg0, %arg2 : i32, i32
  }
  func.func @transform_2(%arg0: i32, %arg1: i32, %arg2: i32) -> (i32, i32) {
    %c0_i32 = arith.constant 0 : i32
    return %arg2, %arg1 : i32, i32
  }
  func.func @transform_3(%arg0: i32, %arg1: i32, %arg2: i32) -> (i32, i32) {
    %c0_i32 = arith.constant 0 : i32
    return %arg0, %arg1 : i32, i32
  }
}

</mosaic_0001>

<llo_original>
// kernel: tpu_custom_call.1
$region0: #{tpu_custom_call.1}
  #allocation0 [shape = 'u32[]', space=smem, size = 0x4, offset = 0x4, fixed_abs, tag = 'smem constant byte address 0x4 - core index']
  #allocation1 [shape = 'u32[144,128]{1,0:T(1,128)}', space=vmem, size = 0x12000, scoped, tag = 'internal scratch']
  #allocation2 [shape = 'f32[32,128]{1,0:T(8,128)}', space=vmem, size = 0x4000, scoped, tag = 'scratch operand']
  %s0 = inlined_call_operand.vmem [shape: f32[32,1], index: 0, kind: input, shape index: {}]
  %s1 = inlined_call_operand.vmem [shape: bf16[32,256], index: 1, kind: input, shape index: {}]
  %s2 = inlined_call_operand.hbm [shape: bf16[256,128], index: 2, kind: input, shape index: {}]
  %s3 = inlined_call_operand.hbm [shape: f32[32,128], index: 3, kind: output, shape index: {}]
  %s4 = sld [smem:[#allocation0]]
  $region34: #{tpu_custom_call.1} parent=0
    _
  %s6 = ssub.s32 1, %s4
  %s7 = scalar_select 0, %s6, %s4
  $region1: #{tpu_custom_call.1} parent=0
    #allocation3 [shape = 'u8[65536]{0}', space=vmem, size = 0x10000, scoped, tag = 'input window, operand 2, single buffered']
    #allocation4 [shape = 's32[1]{0}', space=sflag, size = 0x4, scoped, tag = 'scoped memory for tpu_custom_call.1']
    #allocation5 [shape = 's32[1]{0}', space=sflag, size = 0x4, scoped, tag = 'scoped memory for tpu_custom_call.1']
    #allocation6 [shape = 'u8[16384]{0}', space=vmem, size = 0x4000, scoped, tag = 'output window, operand 0, single buffered']
    %8 = vsyncpa [#allocation4], 0
    %9 = vsyncpa [#allocation5], 0
    // Predicated region
    $region2: #{tpu_custom_call.1} parent=1 // pred_check
      _
    $region3: #{tpu_custom_call.1} parent=1 // pred_check_branch
      %11 = sbr.rel (0) target = $region5
    $region4: #{tpu_custom_call.1} parent=1 // pred_region
      _
    $region5: #{tpu_custom_call.1} parent=1 // pred_fallthru
      _
    // Predicated region
    $region6: #{tpu_custom_call.1} parent=1 // pred_check
      _
    $region7: #{tpu_custom_call.1} parent=1 // pred_check_branch
      %13 = sbr.rel (0) target = $region9
    $region8: #{tpu_custom_call.1} parent=1 // pred_region
      _
    $region9: #{tpu_custom_call.1} parent=1 // pred_fallthru
      _
    // Predicated region
    $region10: #{tpu_custom_call.1} parent=1 // pred_check
      _
    $region11: #{tpu_custom_call.1} parent=1 // pred_check_branch
      %15 = sbr.rel (0) target = $region13
    $region12: #{tpu_custom_call.1} parent=1 // pred_region
      %s17 = ssub.s32 2048, 2048
      %18 = vsyncadd [#allocation4], %s17
      %s19 = sshll.u32 [#allocation3], 4
      %s20 = int_to_ptr.vmem [resolvable:$true] %s19
      %25 = dma.hbm_to_vmem [thread:$0]  %s2, 2048, %s20, [#allocation4], 64, 64, 4
    $region13: #{tpu_custom_call.1} parent=1 // pred_fallthru
      _
    // Predicated region
    $region14: #{tpu_custom_call.1} parent=1 // pred_check
      _
    $region15: #{tpu_custom_call.1} parent=1 // pred_check_branch
      %27 = sbr.rel (0) target = $region17
    $region16: #{tpu_custom_call.1} parent=1 // pred_region
      %28 = dma.done [#allocation4], 2048
    $region17: #{tpu_custom_call.1} parent=1 // pred_fallthru
      _
    %p30 = scmp.eq.s32.totalorder 0, 0
    // Predicated region
    $region18: #{tpu_custom_call.1} parent=1 // pred_check
      %p31 = pneg %p30
    $region19: #{tpu_custom_call.1} parent=1 // pred_check_branch
      %33 = sbr.rel (%p31) target = $region21
    $region20: #{tpu_custom_call.1} parent=1 // pred_region
      %34 = vst [vmem:[#allocation2] sm:$0xff] 0.0
      %35 = vst [vmem:[#allocation2 + $0x8] sm:$0xff] 0.0
      %36 = vst [vmem:[#allocation2 + $0x10] sm:$0xff] 0.0
      %37 = vst [vmem:[#allocation2 + $0x18] sm:$0xff] 0.0
    $region21: #{tpu_custom_call.1} parent=1 // pred_fallthru
      _
    %v38 = vld [vmem:[#allocation2] sm:$0xff]
    %v39 = vld [vmem:[#allocation2 + $0x8] sm:$0xff]
    %v40 = vld [vmem:[#allocation2 + $0x10] sm:$0xff]
    %v41 = vld [vmem:[#allocation2 + $0x18] sm:$0xff]
    %v42 = vld [vmem:[%s1] sm:$0xff]
    %v43 = vld [vmem:[%s1 + $0x8] sm:$0xff]
    %v44 = vld [vmem:[%s1 + $0x10] sm:$0xff]
    %v45 = vld [vmem:[%s1 + $0x18] sm:$0xff]
    %v46 = vld [vmem:[#allocation3] sm:$0xf]
    %v47 = vld [vmem:[#allocation3 + $0x4] sm:$0xf]
    %v48 = vld [vmem:[#allocation3 + $0x8] sm:$0xf]
    %v49 = vld [vmem:[#allocation3 + $0xc] sm:$0xf]
    %v50 = vld [vmem:[#allocation3 + $0x10] sm:$0xf]
    %v51 = vld [vmem:[#allocation3 + $0x14] sm:$0xf]
    %v52 = vld [vmem:[#allocation3 + $0x18] sm:$0xf]
    %v53 = vld [vmem:[#allocation3 + $0x1c] sm:$0xf]
    %v54 = vld [vmem:[#allocation3 + $0x20] sm:$0xf]
    %v55 = vld [vmem:[#allocation3 + $0x24] sm:$0xf]
    %v56 = vld [vmem:[#allocation3 + $0x28] sm:$0xf]
    %v57 = vld [vmem:[#allocation3 + $0x2c] sm:$0xf]
    %v58 = vld [vmem:[#allocation3 + $0x30] sm:$0xf]
    %v59 = vld [vmem:[#allocation3 + $0x34] sm:$0xf]
    %v60 = vld [vmem:[#allocation3 + $0x38] sm:$0xf]
    %v61 = vld [vmem:[#allocation3 + $0x3c] sm:$0xf]
    %v62 = vld [vmem:[#allocation3 + $0x40] sm:$0xf]
    %v63 = vld [vmem:[#allocation3 + $0x44] sm:$0xf]
    %v64 = vld [vmem:[#allocation3 + $0x48] sm:$0xf]
    %v65 = vld [vmem:[#allocation3 + $0x4c] sm:$0xf]
    %v66 = vld [vmem:[#allocation3 + $0x50] sm:$0xf]
    %v67 = vld [vmem:[#allocation3 + $0x54] sm:$0xf]
    %v68 = vld [vmem:[#allocation3 + $0x58] sm:$0xf]
    %v69 = vld [vmem:[#allocation3 + $0x5c] sm:$0xf]
    %v70 = vld [vmem:[#allocation3 + $0x60] sm:$0xf]
    %v71 = vld [vmem:[#allocation3 + $0x64] sm:$0xf]
    %v72 = vld [vmem:[#allocation3 + $0x68] sm:$0xf]
    %v73 = vld [vmem:[#allocation3 + $0x6c] sm:$0xf]
    %v74 = vld [vmem:[#allocation3 + $0x70] sm:$0xf]
    %v75 = vld [vmem:[#allocation3 + $0x74] sm:$0xf]
    %v76 = vld [vmem:[#allocation3 + $0x78] sm:$0xf]
    %v77 = vld [vmem:[#allocation3 + $0x7c] sm:$0xf]
    %v82 = vunpack.c.l.b16 %v42
    %v83 = vunpack.c.h.b16 %v42
    %v84 = vunpack.c.l.b16 %v43
    %v85 = vunpack.c.h.b16 %v43
    %v86 = vunpack.c.l.b16 %v44
    %v87 = vunpack.c.h.b16 %v44
    %v88 = vunpack.c.l.b16 %v45
    %v89 = vunpack.c.h.b16 %v45
    %v90 = vpack.c.b16 %v84, %v82
    %v91 = vpack.c.b16 %v85, %v83
    %v92 = vpack.c.b16 %v88, %v86
    %v93 = vpack.c.b16 %v89, %v87
    %v130 = vunpack.c.l.b16 %v46
    %v131 = vunpack.c.l.b16 %v47
    %v132 = vunpack.c.l.b16 %v48
    %v133 = vunpack.c.l.b16 %v49
    %v134 = vunpack.c.l.b16 %v50
    %v135 = vunpack.c.l.b16 %v51
    %v136 = vunpack.c.l.b16 %v52
    %v137 = vunpack.c.l.b16 %v53
    %v138 = vunpack.c.l.b16 %v54
    %v139 = vunpack.c.l.b16 %v55
    %v140 = vunpack.c.l.b16 %v56
    %v141 = vunpack.c.l.b16 %v57
    %v142 = vunpack.c.l.b16 %v58
    %v143 = vunpack.c.l.b16 %v59
    %v144 = vunpack.c.l.b16 %v60
    %v145 = vunpack.c.l.b16 %v61
    %v146 = vunpack.c.l.b16 %v62
    %v147 = vunpack.c.l.b16 %v63
    %v148 = vunpack.c.l.b16 %v64
    %v149 = vunpack.c.l.b16 %v65
    %v150 = vunpack.c.l.b16 %v66
    %v151 = vunpack.c.l.b16 %v67
    %v152 = vunpack.c.l.b16 %v68
    %v153 = vunpack.c.l.b16 %v69
    %v154 = vunpack.c.l.b16 %v70
    %v155 = vunpack.c.l.b16 %v71
    %v156 = vunpack.c.l.b16 %v72
    %v157 = vunpack.c.l.b16 %v73
    %v158 = vunpack.c.l.b16 %v74
    %v159 = vunpack.c.l.b16 %v75
    %v160 = vunpack.c.l.b16 %v76
    %v161 = vunpack.c.l.b16 %v77
    %v162 = vpack.c.b16 %v131, %v130
    %v163 = vpack.c.b16 %v133, %v132
    %v164 = vpack.c.b16 %v135, %v134
    %v165 = vpack.c.b16 %v137, %v136
    %v166 = vpack.c.b16 %v139, %v138
    %v167 = vpack.c.b16 %v141, %v140
    %v168 = vpack.c.b16 %v143, %v142
    %v169 = vpack.c.b16 %v145, %v144
    %v170 = vpack.c.b16 %v147, %v146
    %v171 = vpack.c.b16 %v149, %v148
    %v172 = vpack.c.b16 %v151, %v150
    %v173 = vpack.c.b16 %v153, %v152
    %v174 = vpack.c.b16 %v155, %v154
    %v175 = vpack.c.b16 %v157, %v156
    %v176 = vpack.c.b16 %v159, %v158
    %v177 = vpack.c.b16 %v161, %v160
    %194 = vmatprep.subr.bf16.mxu0 0
    %195 = vmatpush1.bf16.msra.mxu0 %v169
    %196 = vmatprep.subr.bf16.mxu0 0
    %197 = vmatpush1.bf16.msra.mxu0 %v168
    %198 = vmatprep.subr.bf16.mxu0 0
    %199 = vmatpush1.bf16.msra.mxu0 %v167
    %200 = vmatprep.subr.bf16.mxu0 0
    %201 = vmatpush1.bf16.msra.mxu0 %v166
    %202 = vmatprep.subr.bf16.mxu0 0
    %203 = vmatpush1.bf16.msra.mxu0 %v165
    %204 = vmatprep.subr.bf16.mxu0 0
    %205 = vmatpush1.bf16.msra.mxu0 %v164
    %206 = vmatprep.subr.bf16.mxu0 0
    %207 = vmatpush1.bf16.msra.mxu0 %v163
    %208 = vmatprep.subr.bf16.mxu0 0
    %209 = vmatpush1.bf16.msra.mxu0 %v162
    %210 = vmatprep.subr.bf16.mxu0 0
    %211 = vmatpush2.bf16.msra.mxu0 %v177
    %212 = vmatprep.subr.bf16.mxu0 0
    %213 = vmatpush2.bf16.msra.mxu0 %v176
    %214 = vmatprep.subr.bf16.mxu0 0
    %215 = vmatpush2.bf16.msra.mxu0 %v175
    %216 = vmatprep.subr.bf16.mxu0 0
    %217 = vmatpush2.bf16.msra.mxu0 %v174
    %218 = vmatprep.subr.bf16.mxu0 0
    %219 = vmatpush2.bf16.msra.mxu0 %v173
    %220 = vmatprep.subr.bf16.mxu0 0
    %221 = vmatpush2.bf16.msra.mxu0 %v172
    %222 = vmatprep.subr.bf16.mxu0 0
    %223 = vmatpush2.bf16.msra.mxu0 %v171
    %224 = vmatprep.subr.bf16.mxu0 0
    %225 = vmatpush2.bf16.msra.mxu0 %v170
    %226 = vmatprep.mubr.bf16.mxu0 %v91
    %227 = vmatmul.mubr.bf16.gmra.mxu0 %v90
    %v228 = vpop.f32.mrf.mxu0
    %v229 = vadd.f32 0.0, %v228
    %v230 = vpop.f32.mrf.mxu0
    %v231 = vpop.f32.mrf.mxu0
    %v232 = vadd.f32 0.0, %v231
    %v233 = vpop.f32.mrf.mxu0
    %234 = vmatprep.mubr.bf16.mxu0 %v93
    %235 = vmatmul.mubr.bf16.gmra.mxu0 %v92
    %v236 = vpop.f32.mrf.mxu0
    %v237 = vadd.f32 0.0, %v236
    %v238 = vpop.f32.mrf.mxu0
    %v239 = vpop.f32.mrf.mxu0
    %v240 = vadd.f32 0.0, %v239
    %v241 = vpop.f32.mrf.mxu0
    %242 = vdwg.mxu0
    %v243 = vadd.f32 %v38, %v229
    %v244 = vadd.f32 %v39, %v232
    %v245 = vadd.f32 %v40, %v237
    %v246 = vadd.f32 %v41, %v240
    %247 = vst [vmem:[#allocation2] sm:$0xff] %v243
    %248 = vst [vmem:[#allocation2 + $0x8] sm:$0xff] %v244
    %249 = vst [vmem:[#allocation2 + $0x10] sm:$0xff] %v245
    %250 = vst [vmem:[#allocation2 + $0x18] sm:$0xff] %v246
    // Predicated region
    $region22: #{tpu_custom_call.1} parent=1 // pred_check
      %p251 = pneg %p30
    $region23: #{tpu_custom_call.1} parent=1 // pred_check_branch
      %253 = sbr.rel (%p251) target = $region25
    $region24: #{tpu_custom_call.1} parent=1 // pred_region
      %v254 = vld [vmem:[#allocation2] sm:$0xff]
      %v255 = vld [vmem:[#allocation2 + $0x8] sm:$0xff]
      %v256 = vld [vmem:[#allocation2 + $0x10] sm:$0xff]
      %v257 = vld [vmem:[#allocation2 + $0x18] sm:$0xff]
      %v258 = vld [vmem:[%s0] sm:$0xff]
      %v259 = vld [vmem:[%s0 + $0x8] sm:$0xff]
      %v260 = vld [vmem:[%s0 + $0x10] sm:$0xff]
      %v261 = vld [vmem:[%s0 + $0x18] sm:$0xff]
      %263 = vset.pattern.permute.xlu0 0
      %264 = vperm.xlu0 %263, %v258
      %v265 = vpop.permute.xlu0 %264
      %268 = vset.pattern.permute.xlu0 0
      %269 = vperm.xlu0 %268, %v259
      %v270 = vpop.permute.xlu0 %269
      %273 = vset.pattern.permute.xlu0 0
      %274 = vperm.xlu0 %273, %v260
      %v275 = vpop.permute.xlu0 %274
      %278 = vset.pattern.permute.xlu0 0
      %279 = vperm.xlu0 %278, %v261
      %v280 = vpop.permute.xlu0 %279
      %v282 = vmul.f32 %v254, %v265
      %v283 = vmul.f32 %v255, %v270
      %v284 = vmul.f32 %v256, %v275
      %v285 = vmul.f32 %v257, %v280
      %286 = vst [vmem:[#allocation6] sm:$0xff] %v282
      %287 = vst [vmem:[#allocation6 + $0x8] sm:$0xff] %v283
      %288 = vst [vmem:[#allocation6 + $0x10] sm:$0xff] %v284
      %289 = vst [vmem:[#allocation6 + $0x18] sm:$0xff] %v285
    $region25: #{tpu_custom_call.1} parent=1 // pred_fallthru
      _
    // Predicated region
    $region26: #{tpu_custom_call.1} parent=1 // pred_check
      _
    $region27: #{tpu_custom_call.1} parent=1 // pred_check_branch
      %291 = sbr.rel (0) target = $region29
    $region28: #{tpu_custom_call.1} parent=1 // pred_region
      %s293 = ssub.s32 512, 512
      %294 = vsyncadd [#allocation5], %s293
      %s295 = sshll.u32 [#allocation6], 4
      %s296 = int_to_ptr.vmem [resolvable:$true] %s295
      %301 = dma.vmem_to_hbm [thread:$0]  %s296, 512, %s3, [#allocation5], 128, 128, 8
    $region29: #{tpu_custom_call.1} parent=1 // pred_fallthru
      _
    // Predicated region
    $region30: #{tpu_custom_call.1} parent=1 // pred_check
      _
    $region31: #{tpu_custom_call.1} parent=1 // pred_check_branch
      %303 = sbr.rel (0) target = $region33
    $region32: #{tpu_custom_call.1} parent=1 // pred_region
      %304 = dma.done [#allocation5], 512
    $region33: #{tpu_custom_call.1} parent=1 // pred_fallthru
      _
    %305 = vsyncpa [#allocation4], 1
    %306 = vsyncpa [#allocation5], 1

</llo_original>
